<compile_context>
chip_gen: v7x
topology: tpu7x:2x2x1
jax: 0.10.0
libtpu: 0.0.40
codegen_flags: <defaults>
</compile_context>

<pallas_src>
import math

import jax
import jax.numpy as jnp
from jax.experimental import pallas as pl
from jax.experimental.pallas import tpu as pltpu


# ----------------------------------------------------------------------------
# helpers
# ----------------------------------------------------------------------------
def _round_up(x, m):
    return ((x + m - 1) // m) * m


def _pick_tile(padded, cap=512):
    """Largest of (cap, 256, 128) that divides `padded` (padded is a 128-mult)."""
    for cand in (cap, 256, 128):
        if padded % cand == 0:
            return min(cand, padded)
    return padded


def _pad2(a, rows, cols):
    pr, pc = rows - a.shape[0], cols - a.shape[1]
    if pr or pc:
        a = jnp.pad(a, ((0, pr), (0, pc)))
    return a


# ----------------------------------------------------------------------------
# kernels
# ----------------------------------------------------------------------------
def _noisy_linear_train_kernel(x_ref, wmu_ref, wsig_ref, ein_ref, eout_ref,
                               bmu_ref, bsig_ref, o_ref, acc_ref):
    k = pl.program_id(2)

    @pl.when(k == 0)
    def _init():
        acc_ref[...] = jnp.zeros_like(acc_ref)

    # Factorized noise rebuilt per-tile on the VPU (no HBM eps matrix):
    #   eps tile in (K, N) layout = eps_in[:, None] * eps_out[None, :]
    eps_tile = ein_ref[...] * eout_ref[...]                  # (tk,1)*(1,tn)->(tk,tn)
    w_eff = wmu_ref[...] + wsig_ref[...] * eps_tile          # (tk, tn)
    acc_ref[...] += jnp.dot(x_ref[...], w_eff,
                            preferred_element_type=jnp.float32)

    @pl.when(k == pl.num_programs(2) - 1)
    def _finalize():
        b_eff = bmu_ref[...] + bsig_ref[...] * eout_ref[...]  # (1, tn)
        o_ref[...] = (acc_ref[...] + b_eff).astype(o_ref.dtype)


def _noisy_linear_eval_kernel(x_ref, wmu_ref, bmu_ref, o_ref, acc_ref):
    k = pl.program_id(2)

    @pl.when(k == 0)
    def _init():
        acc_ref[...] = jnp.zeros_like(acc_ref)

    acc_ref[...] += jnp.dot(x_ref[...], wmu_ref[...],
                            preferred_element_type=jnp.float32)

    @pl.when(k == pl.num_programs(2) - 1)
    def _finalize():
        o_ref[...] = (acc_ref[...] + bmu_ref[...]).astype(o_ref.dtype)


# ----------------------------------------------------------------------------
# wrapper
# ----------------------------------------------------------------------------
def noisy_linear(x, weight_mu, weight_sigma, eps_in, eps_out,
                 bias_mu, bias_sigma, *, training=True):
    """Pallas-backed NoisyLinear.forward.

    x:                 (B, in_features)  float32
    weight_mu/sigma:   (out_features, in_features) float32 (torch layout)
    eps_in:            (in_features,)   factorized noise
    eps_out:           (out_features,)  factorized noise (== bias_epsilon)
    bias_mu/sigma:     (out_features,)
    returns:           (B, out_features)
    """
    B, K = x.shape
    N = weight_mu.shape[0]
    dtype = x.dtype
    itemsize = jnp.dtype(dtype).itemsize

    # Lane/sublane friendly padded sizes and tiles.
    Kp = _round_up(K, 128)
    Np = _round_up(N, 128)
    tk = _pick_tile(Kp)
    tn = _pick_tile(Np)
    tm = min(_round_up(B, 8), 128)
    Mp = _round_up(_round_up(B, 8), tm)
    grid = (Mp // tm, Np // tn, Kp // tk)

    # Layout plumbing (once, outside the kernel): (K, N) weights, row biases.
    x_p = _pad2(x, Mp, Kp)
    wmu_kn = _pad2(weight_mu.T, Kp, Np)
    bmu_row = _pad2(bias_mu.reshape(1, N), 1, Np)

    x_spec = pl.BlockSpec((tm, tk), lambda i, j, k: (i, k))
    w_spec = pl.BlockSpec((tk, tn), lambda i, j, k: (k, j))
    col_spec = pl.BlockSpec((tk, 1), lambda i, j, k: (k, 0))
    row_spec = pl.BlockSpec((1, tn), lambda i, j, k: (0, j))
    out_spec = pl.BlockSpec((tm, tn), lambda i, j, k: (i, j))

    n_w = 2 if training else 1
    vmem_need = (2 * (tm * tk + n_w * tk * tn + tm * tn) * itemsize   # dbl-buffered
                 + tm * tn * 4                                        # f32 acc
                 + 2 * (tk + 3 * tn) * itemsize)                      # small vectors
    compiler_params = pltpu.CompilerParams(
        dimension_semantics=("parallel", "parallel", "arbitrary"),
        vmem_limit_bytes=min(max(2 * vmem_need, 16 * 1024 * 1024),
                             48 * 1024 * 1024),
    )
    cost = pl.CostEstimate(
        flops=2 * Mp * Kp * Np + (3 * Kp * Np if training else 0),
        transcendentals=0,
        bytes_accessed=(Mp * Kp + n_w * Kp * Np + Mp * Np
                        + 4 * Np + Kp) * itemsize,
    )

    if training:
        wsig_kn = _pad2(weight_sigma.T, Kp, Np)
        ein_col = _pad2(eps_in.reshape(K, 1), Kp, 1)
        eout_row = _pad2(eps_out.reshape(1, N), 1, Np)
        bsig_row = _pad2(bias_sigma.reshape(1, N), 1, Np)

        grid_spec = pltpu.PrefetchScalarGridSpec(
            num_scalar_prefetch=0, grid=grid,
            in_specs=[x_spec, w_spec, w_spec, col_spec, row_spec,
                      row_spec, row_spec],
            out_specs=out_spec,
            scratch_shapes=[pltpu.VMEM((tm, tn), jnp.float32)],
        )
        out_p = pl.pallas_call(
            _noisy_linear_train_kernel,
            out_shape=jax.ShapeDtypeStruct((Mp, Np), dtype),
            grid_spec=grid_spec,
            compiler_params=compiler_params,
            cost_estimate=cost,
        )(x_p, wmu_kn, wsig_kn, ein_col, eout_row, bmu_row, bsig_row)
    else:
        # Slim eval call: only x, W_mu, b_mu are DMA'd.
        grid_spec = pltpu.PrefetchScalarGridSpec(
            num_scalar_prefetch=0, grid=grid,
            in_specs=[x_spec, w_spec, row_spec],
            out_specs=out_spec,
            scratch_shapes=[pltpu.VMEM((tm, tn), jnp.float32)],
        )
        out_p = pl.pallas_call(
            _noisy_linear_eval_kernel,
            out_shape=jax.ShapeDtypeStruct((Mp, Np), dtype),
            grid_spec=grid_spec,
            compiler_params=compiler_params,
            cost_estimate=cost,
        )(x_p, wmu_kn, bmu_row)

    return out_p[:B, :N]


# ----------------------------------------------------------------------------
# parameter / noise construction mirroring reset_parameters + reset_noise
# ----------------------------------------------------------------------------
def init_noisy_linear_params(key, in_features, out_features, std_init=1.0):
    k_wmu, k_bmu, k_ein, k_eout = jax.random.split(key, 4)
    mu_range = 1.0 / math.sqrt(in_features)

    weight_mu = jax.random.uniform(
        k_wmu, (out_features, in_features),
        minval=-mu_range, maxval=mu_range, dtype=jnp.float32)
    weight_sigma = jnp.full((out_features, in_features),
                            std_init / math.sqrt(in_features), jnp.float32)
    bias_mu = jax.random.uniform(
        k_bmu, (out_features,),
        minval=-mu_range, maxval=mu_range, dtype=jnp.float32)
    bias_sigma = jnp.full((out_features,),
                          std_init / math.sqrt(out_features), jnp.float32)

    def scale_noise(k, size):
        v = jax.random.normal(k, (size,), dtype=jnp.float32)
        return jnp.sign(v) * jnp.sqrt(jnp.abs(v))

    eps_in = scale_noise(k_ein, in_features)
    eps_out = scale_noise(k_eout, out_features)
    weight_epsilon = jnp.outer(eps_out, eps_in)   # reference only (not DMA'd)
    bias_epsilon = eps_out

    return dict(weight_mu=weight_mu, weight_sigma=weight_sigma,
                bias_mu=bias_mu, bias_sigma=bias_sigma,
                eps_in=eps_in, eps_out=eps_out,
                weight_epsilon=weight_epsilon, bias_epsilon=bias_epsilon)


def _ref_noisy_linear(x, p, training=True):
    if training:
        w = p["weight_mu"] + p["weight_sigma"] * p["weight_epsilon"]
        b = p["bias_mu"] + p["bias_sigma"] * p["bias_epsilon"]
    else:
        w, b = p["weight_mu"], p["bias_mu"]
    return x @ w.T + b


if __name__ == "__main__":
    key = jax.random.PRNGKey(0)
    k_param, k_x = jax.random.split(key)

    batch, in_features, out_features = 4, 32, 64
    params = init_noisy_linear_params(k_param, in_features, out_features,
                                      std_init=1.0)
    x = jax.random.normal(k_x, (batch, in_features), dtype=jnp.float32)

    y_train = noisy_linear(x, params["weight_mu"], params["weight_sigma"],
                           params["eps_in"], params["eps_out"],
                           params["bias_mu"], params["bias_sigma"],
                           training=True)
    y_eval = noisy_linear(x, params["weight_mu"], params["weight_sigma"],
                          params["eps_in"], params["eps_out"],
                          params["bias_mu"], params["bias_sigma"],
                          training=False)
    jax.block_until_ready((y_train, y_eval))

    ref_train = _ref_noisy_linear(x, params, training=True)
    ref_eval = _ref_noisy_linear(x, params, training=False)
    assert y_train.shape == (batch, out_features)
    assert y_eval.shape == (batch, out_features)
    assert jnp.allclose(y_train, ref_train, atol=1e-5, rtol=1e-5)
    assert jnp.allclose(y_eval, ref_eval, atol=1e-5, rtol=1e-5)

    print("KERNEL_OK")
</pallas_src>

<mosaic_0001>
module attributes {stable_mosaic.version = 11 : i64} {
  func.func @_noisy_linear_train_kernel(%arg0: i32, %arg1: i32, %arg2: i32, %arg3: memref<8x128xf32, #tpu.memory_space<vmem>>, %arg4: memref<128x128xf32, #tpu.memory_space<vmem>>, %arg5: memref<128x128xf32, #tpu.memory_space<vmem>>, %arg6: memref<128x1xf32, #tpu.memory_space<vmem>>, %arg7: memref<1x128xf32, #tpu.memory_space<vmem>>, %arg8: memref<1x128xf32, #tpu.memory_space<vmem>>, %arg9: memref<1x128xf32, #tpu.memory_space<vmem>>, %arg10: memref<8x128xf32, #tpu.memory_space<vmem>>, %arg11: memref<8x128xf32, #tpu.memory_space<vmem>>) attributes {dimension_semantics = [#tpu.dimension_semantics<parallel>, #tpu.dimension_semantics<parallel>, #tpu.dimension_semantics<arbitrary>], iteration_bounds = array<i64: 1, 1, 1>, scalar_prefetch = 0 : i64, scratch_operands = 1 : i64, tpu.core_type = #tpu.core_type<tc>, window_params = [{transform_indices = @transform_0, window_bounds = array<i64: 8, 128>}, {transform_indices = @transform_1, window_bounds = array<i64: 128, 128>}, {transform_indices = @transform_2, window_bounds = array<i64: 128, 128>}, {transform_indices = @transform_3, window_bounds = array<i64: 128, 1>}, {transform_indices = @transform_4, window_bounds = array<i64: 1, 128>}, {transform_indices = @transform_5, window_bounds = array<i64: 1, 128>}, {transform_indices = @transform_6, window_bounds = array<i64: 1, 128>}, {transform_indices = @transform_7, window_bounds = array<i64: 8, 128>}]} {
    %c0_i32 = arith.constant 0 : i32
    %0 = arith.cmpi eq, %arg2, %c0_i32 : i32
    %1 = arith.extui %0 : i1 to i32
    %c0_i32_0 = arith.constant 0 : i32
    %2 = arith.cmpi ne, %1, %c0_i32_0 : i32
    scf.if %2 {
      %cst_16 = arith.constant 0.000000e+00 : f32
      %20 = vector.broadcast %cst_16 : f32 to vector<8x128xf32>
      %c0_17 = arith.constant 0 : index
      %c0_18 = arith.constant 0 : index
      %21 = vector.load %arg11[%c0_17, %c0_18] : memref<8x128xf32, #tpu.memory_space<vmem>>, vector<8x128xf32>
      tpu.vector_store %arg11[%c0_17, %c0_18], %20 {strides = array<i32>} : memref<8x128xf32, #tpu.memory_space<vmem>>, vector<8x128xf32>,
    } else {
    }
    %c0 = arith.constant 0 : index
    %c0_1 = arith.constant 0 : index
    %3 = vector.load %arg6[%c0, %c0_1] : memref<128x1xf32, #tpu.memory_space<vmem>>, vector<128x1xf32>
    %c0_2 = arith.constant 0 : index
    %c0_3 = arith.constant 0 : index
    %4 = vector.load %arg7[%c0_2, %c0_3] : memref<1x128xf32, #tpu.memory_space<vmem>>, vector<1x128xf32>
    %5 = vector.broadcast %3 : vector<128x1xf32> to vector<128x128xf32>
    %6 = vector.broadcast %4 : vector<1x128xf32> to vector<128x128xf32>
    %7 = arith.mulf %5, %6 : vector<128x128xf32>
    %c0_4 = arith.constant 0 : index
    %c0_5 = arith.constant 0 : index
    %8 = vector.load %arg4[%c0_4, %c0_5] : memref<128x128xf32, #tpu.memory_space<vmem>>, vector<128x128xf32>
    %c0_6 = arith.constant 0 : index
    %c0_7 = arith.constant 0 : index
    %9 = vector.load %arg5[%c0_6, %c0_7] : memref<128x128xf32, #tpu.memory_space<vmem>>, vector<128x128xf32>
    %10 = arith.mulf %9, %7 : vector<128x128xf32>
    %11 = arith.addf %8, %10 : vector<128x128xf32>
    %c0_8 = arith.constant 0 : index
    %c0_9 = arith.constant 0 : index
    %12 = vector.load %arg11[%c0_8, %c0_9] : memref<8x128xf32, #tpu.memory_space<vmem>>, vector<8x128xf32>
    %c0_10 = arith.constant 0 : index
    %c0_11 = arith.constant 0 : index
    %13 = vector.load %arg3[%c0_10, %c0_11] : memref<8x128xf32, #tpu.memory_space<vmem>>, vector<8x128xf32>
    %cst = arith.constant dense<0.000000e+00> : vector<8x128xf32>
    %14 = tpu.matmul %13, %11, %cst {dimension_numbers = #tpu.dot_dimension_numbers<[1], [0], [0], [1], [0, 0, 1, 1], [], []>} : vector<8x128xf32>, vector<128x128xf32>, vector<8x128xf32> -> vector<8x128xf32>
    %15 = arith.addf %12, %14 : vector<8x128xf32>
    %c0_12 = arith.constant 0 : index
    %c0_13 = arith.constant 0 : index
    %16 = vector.load %arg11[%c0_12, %c0_13] : memref<8x128xf32, #tpu.memory_space<vmem>>, vector<8x128xf32>
    tpu.vector_store %arg11[%c0_12, %c0_13], %15 {strides = array<i32>} : memref<8x128xf32, #tpu.memory_space<vmem>>, vector<8x128xf32>,
    %c0_i32_14 = arith.constant 0 : i32
    %17 = arith.cmpi eq, %arg2, %c0_i32_14 : i32
    %18 = arith.extui %17 : i1 to i32
    %c0_i32_15 = arith.constant 0 : i32
    %19 = arith.cmpi ne, %18, %c0_i32_15 : i32
    scf.if %19 {
      %c0_16 = arith.constant 0 : index
      %c0_17 = arith.constant 0 : index
      %20 = vector.load %arg8[%c0_16, %c0_17] : memref<1x128xf32, #tpu.memory_space<vmem>>, vector<1x128xf32>
      %c0_18 = arith.constant 0 : index
      %c0_19 = arith.constant 0 : index
      %21 = vector.load %arg9[%c0_18, %c0_19] : memref<1x128xf32, #tpu.memory_space<vmem>>, vector<1x128xf32>
      %c0_20 = arith.constant 0 : index
      %c0_21 = arith.constant 0 : index
      %22 = vector.load %arg7[%c0_20, %c0_21] : memref<1x128xf32, #tpu.memory_space<vmem>>, vector<1x128xf32>
      %23 = arith.mulf %21, %22 : vector<1x128xf32>
      %24 = arith.addf %20, %23 : vector<1x128xf32>
      %c0_22 = arith.constant 0 : index
      %c0_23 = arith.constant 0 : index
      %25 = vector.load %arg11[%c0_22, %c0_23] : memref<8x128xf32, #tpu.memory_space<vmem>>, vector<8x128xf32>
      %26 = vector.broadcast %24 : vector<1x128xf32> to vector<8x128xf32>
      %27 = arith.addf %25, %26 : vector<8x128xf32>
      %c0_24 = arith.constant 0 : index
      %c0_25 = arith.constant 0 : index
      %28 = vector.load %arg10[%c0_24, %c0_25] : memref<8x128xf32, #tpu.memory_space<vmem>>, vector<8x128xf32>
      tpu.vector_store %arg10[%c0_24, %c0_25], %27 {strides = array<i32>} : memref<8x128xf32, #tpu.memory_space<vmem>>, vector<8x128xf32>,
    } else {
    }
    return
  }
  func.func @transform_0(%arg0: i32, %arg1: i32, %arg2: i32) -> (i32, i32) {
    %c0_i32 = arith.constant 0 : i32
    return %arg0, %arg2 : i32, i32
  }
  func.func @transform_1(%arg0: i32, %arg1: i32, %arg2: i32) -> (i32, i32) {
    %c0_i32 = arith.constant 0 : i32
    return %arg2, %arg1 : i32, i32
  }
  func.func @transform_2(%arg0: i32, %arg1: i32, %arg2: i32) -> (i32, i32) {
    %c0_i32 = arith.constant 0 : i32
    return %arg2, %arg1 : i32, i32
  }
  func.func @transform_3(%arg0: i32, %arg1: i32, %arg2: i32) -> (i32, i32) {
    %c0_i32 = arith.constant 0 : i32
    %c0_i32_0 = arith.constant 0 : i32
    return %arg2, %c0_i32 : i32, i32
  }
  func.func @transform_4(%arg0: i32, %arg1: i32, %arg2: i32) -> (i32, i32) {
    %c0_i32 = arith.constant 0 : i32
    %c0_i32_0 = arith.constant 0 : i32
    return %c0_i32, %arg1 : i32, i32
  }
  func.func @transform_5(%arg0: i32, %arg1: i32, %arg2: i32) -> (i32, i32) {
    %c0_i32 = arith.constant 0 : i32
    %c0_i32_0 = arith.constant 0 : i32
    return %c0_i32, %arg1 : i32, i32
  }
  func.func @transform_6(%arg0: i32, %arg1: i32, %arg2: i32) -> (i32, i32) {
    %c0_i32 = arith.constant 0 : i32
    %c0_i32_0 = arith.constant 0 : i32
    return %c0_i32, %arg1 : i32, i32
  }
  func.func @transform_7(%arg0: i32, %arg1: i32, %arg2: i32) -> (i32, i32) {
    %c0_i32 = arith.constant 0 : i32
    return %arg0, %arg1 : i32, i32
  }
}

</mosaic_0001>

<llo_original>
// kernel: tpu_custom_call.1
$region0: #{tpu_custom_call.1}
  #allocation0 [shape = 'u32[]', space=smem, size = 0x4, offset = 0x4, fixed_abs, tag = 'smem constant byte address 0x4 - core index']
  #allocation1 [shape = 'u32[144,128]{1,0:T(1,128)}', space=vmem, size = 0x12000, scoped, tag = 'internal scratch']
  #allocation2 [shape = 'f32[8,128]{1,0:T(8,128)}', space=vmem, size = 0x1000, scoped, tag = 'scratch operand']
  %s0 = inlined_call_operand.hbm [shape: f32[8,128], index: 0, kind: input, shape index: {}]
  %s1 = inlined_call_operand.vmem [shape: f32[128,128], index: 1, kind: input, shape index: {}]
  %s2 = inlined_call_operand.hbm [shape: f32[128,128], index: 2, kind: input, shape index: {}]
  %s3 = inlined_call_operand.vmem [shape: f32[128,1], index: 3, kind: input, shape index: {}]
  %s4 = inlined_call_operand.vmem [shape: f32[1,128], index: 4, kind: input, shape index: {}]
  %s5 = inlined_call_operand.vmem [shape: f32[1,128], index: 5, kind: input, shape index: {}]
  %s6 = inlined_call_operand.vmem [shape: f32[1,128], index: 6, kind: input, shape index: {}]
  %s7 = inlined_call_operand.hbm [shape: f32[8,128], index: 7, kind: output, shape index: {}]
  %s8 = sld [smem:[#allocation0]]
  $region54: #{tpu_custom_call.1} parent=0
    _
  %s10 = ssub.s32 1, %s8
  %s11 = scalar_select 0, %s10, %s8
  $region1: #{tpu_custom_call.1} parent=0
    #allocation3 [shape = 'u8[4096]{0}', space=vmem, size = 0x1000, scoped, tag = 'input window, operand 0, single buffered']
    #allocation4 [shape = 's32[1]{0}', space=sflag, size = 0x4, scoped, tag = 'scoped memory for tpu_custom_call.1']
    #allocation5 [shape = 's32[1]{0}', space=sflag, size = 0x4, scoped, tag = 'scoped memory for tpu_custom_call.1']
    #allocation6 [shape = 'u8[65536]{0}', space=vmem, size = 0x10000, scoped, tag = 'input window, operand 2, single buffered']
    #allocation7 [shape = 's32[1]{0}', space=sflag, size = 0x4, scoped, tag = 'scoped memory for tpu_custom_call.1']
    #allocation8 [shape = 'u8[4096]{0}', space=vmem, size = 0x1000, scoped, tag = 'output window, operand 0, single buffered']
    %12 = vsyncpa [#allocation4], 0
    %13 = vsyncpa [#allocation7], 0
    %14 = vsyncpa [#allocation5], 0
    // Predicated region
    $region2: #{tpu_custom_call.1} parent=1 // pred_check
      _
    $region3: #{tpu_custom_call.1} parent=1 // pred_check_branch
      %16 = sbr.rel (0) target = $region5
    $region4: #{tpu_custom_call.1} parent=1 // pred_region
      %s18 = ssub.s32 128, 128
      %19 = vsyncadd [#allocation4], %s18
      %s21 = sshll.u32 [#allocation3], 4
      %s22 = int_to_ptr.vmem [resolvable:$true] %s21
      %24 = dma.hbm_to_vmem [thread:$0]  %s0, 128, %s22, [#allocation4]
    $region5: #{tpu_custom_call.1} parent=1 // pred_fallthru
      _
    // Predicated region
    $region6: #{tpu_custom_call.1} parent=1 // pred_check
      _
    $region7: #{tpu_custom_call.1} parent=1 // pred_check_branch
      %26 = sbr.rel (0) target = $region9
    $region8: #{tpu_custom_call.1} parent=1 // pred_region
      _
    $region9: #{tpu_custom_call.1} parent=1 // pred_fallthru
      _
    // Predicated region
    $region10: #{tpu_custom_call.1} parent=1 // pred_check
      _
    $region11: #{tpu_custom_call.1} parent=1 // pred_check_branch
      %28 = sbr.rel (0) target = $region13
    $region12: #{tpu_custom_call.1} parent=1 // pred_region
      %s30 = ssub.s32 2048, 2048
      %31 = vsyncadd [#allocation7], %s30
      %s32 = sshll.u32 [#allocation6], 4
      %s33 = int_to_ptr.vmem [resolvable:$true] %s32
      %38 = dma.hbm_to_vmem [thread:$0]  %s2, 2048, %s33, [#allocation7], 128, 128, 8
    $region13: #{tpu_custom_call.1} parent=1 // pred_fallthru
      _
    // Predicated region
    $region14: #{tpu_custom_call.1} parent=1 // pred_check
      _
    $region15: #{tpu_custom_call.1} parent=1 // pred_check_branch
      %40 = sbr.rel (0) target = $region17
    $region16: #{tpu_custom_call.1} parent=1 // pred_region
      _
    $region17: #{tpu_custom_call.1} parent=1 // pred_fallthru
      _
    // Predicated region
    $region18: #{tpu_custom_call.1} parent=1 // pred_check
      _
    $region19: #{tpu_custom_call.1} parent=1 // pred_check_branch
      %42 = sbr.rel (0) target = $region21
    $region20: #{tpu_custom_call.1} parent=1 // pred_region
      _
    $region21: #{tpu_custom_call.1} parent=1 // pred_fallthru
      _
    // Predicated region
    $region22: #{tpu_custom_call.1} parent=1 // pred_check
      _
    $region23: #{tpu_custom_call.1} parent=1 // pred_check_branch
      %44 = sbr.rel (0) target = $region25
    $region24: #{tpu_custom_call.1} parent=1 // pred_region
      _
    $region25: #{tpu_custom_call.1} parent=1 // pred_fallthru
      _
    // Predicated region
    $region26: #{tpu_custom_call.1} parent=1 // pred_check
      _
    $region27: #{tpu_custom_call.1} parent=1 // pred_check_branch
      %46 = sbr.rel (0) target = $region29
    $region28: #{tpu_custom_call.1} parent=1 // pred_region
      _
    $region29: #{tpu_custom_call.1} parent=1 // pred_fallthru
      _
    // Predicated region
    $region30: #{tpu_custom_call.1} parent=1 // pred_check
      _
    $region31: #{tpu_custom_call.1} parent=1 // pred_check_branch
      %48 = sbr.rel (0) target = $region33
    $region32: #{tpu_custom_call.1} parent=1 // pred_region
      %49 = dma.done [#allocation4], 128
    $region33: #{tpu_custom_call.1} parent=1 // pred_fallthru
      _
    // Predicated region
    $region34: #{tpu_custom_call.1} parent=1 // pred_check
      _
    $region35: #{tpu_custom_call.1} parent=1 // pred_check_branch
      %51 = sbr.rel (0) target = $region37
    $region36: #{tpu_custom_call.1} parent=1 // pred_region
      %52 = dma.done [#allocation7], 2048
    $region37: #{tpu_custom_call.1} parent=1 // pred_fallthru
      _
    %p53 = scmp.eq.s32.totalorder 0, 0
    // Predicated region
    $region38: #{tpu_custom_call.1} parent=1 // pred_check
      %p54 = pneg %p53
    $region39: #{tpu_custom_call.1} parent=1 // pred_check_branch
      %56 = sbr.rel (%p54) target = $region41
    $region40: #{tpu_custom_call.1} parent=1 // pred_region
      %57 = vst [vmem:[#allocation2] sm:$0xff] 0.0
    $region41: #{tpu_custom_call.1} parent=1 // pred_fallthru
      _
    %v58 = vld [vmem:[%s3] sm:$0xff]
    %v59 = vld [vmem:[%s3 + $0x8] sm:$0xff]
    %v60 = vld [vmem:[%s3 + $0x10] sm:$0xff]
    %v61 = vld [vmem:[%s3 + $0x18] sm:$0xff]
    %v62 = vld [vmem:[%s3 + $0x20] sm:$0xff]
    %v63 = vld [vmem:[%s3 + $0x28] sm:$0xff]
    %v64 = vld [vmem:[%s3 + $0x30] sm:$0xff]
    %v65 = vld [vmem:[%s3 + $0x38] sm:$0xff]
    %v66 = vld [vmem:[%s3 + $0x40] sm:$0xff]
    %v67 = vld [vmem:[%s3 + $0x48] sm:$0xff]
    %v68 = vld [vmem:[%s3 + $0x50] sm:$0xff]
    %v69 = vld [vmem:[%s3 + $0x58] sm:$0xff]
    %v70 = vld [vmem:[%s3 + $0x60] sm:$0xff]
    %v71 = vld [vmem:[%s3 + $0x68] sm:$0xff]
    %v72 = vld [vmem:[%s3 + $0x70] sm:$0xff]
    %v73 = vld [vmem:[%s3 + $0x78] sm:$0xff]
    %v74 = vld [vmem:[%s4] sm:$0x1]
    %76 = vset.pattern.permute.xlu0 0
    %77 = vperm.xlu0 %76, %v58
    %v78 = vpop.permute.xlu0 %77
    %81 = vset.pattern.permute.xlu0 0
    %82 = vperm.xlu0 %81, %v59
    %v83 = vpop.permute.xlu0 %82
    %86 = vset.pattern.permute.xlu0 0
    %87 = vperm.xlu0 %86, %v60
    %v88 = vpop.permute.xlu0 %87
    %91 = vset.pattern.permute.xlu0 0
    %92 = vperm.xlu0 %91, %v61
    %v93 = vpop.permute.xlu0 %92
    %96 = vset.pattern.permute.xlu0 0
    %97 = vperm.xlu0 %96, %v62
    %v98 = vpop.permute.xlu0 %97
    %101 = vset.pattern.permute.xlu0 0
    %102 = vperm.xlu0 %101, %v63
    %v103 = vpop.permute.xlu0 %102
    %106 = vset.pattern.permute.xlu0 0
    %107 = vperm.xlu0 %106, %v64
    %v108 = vpop.permute.xlu0 %107
    %111 = vset.pattern.permute.xlu0 0
    %112 = vperm.xlu0 %111, %v65
    %v113 = vpop.permute.xlu0 %112
    %116 = vset.pattern.permute.xlu0 0
    %117 = vperm.xlu0 %116, %v66
    %v118 = vpop.permute.xlu0 %117
    %121 = vset.pattern.permute.xlu0 0
    %122 = vperm.xlu0 %121, %v67
    %v123 = vpop.permute.xlu0 %122
    %126 = vset.pattern.permute.xlu0 0
    %127 = vperm.xlu0 %126, %v68
    %v128 = vpop.permute.xlu0 %127
    %131 = vset.pattern.permute.xlu0 0
    %132 = vperm.xlu0 %131, %v69
    %v133 = vpop.permute.xlu0 %132
    %136 = vset.pattern.permute.xlu0 0
    %137 = vperm.xlu0 %136, %v70
    %v138 = vpop.permute.xlu0 %137
    %141 = vset.pattern.permute.xlu0 0
    %142 = vperm.xlu0 %141, %v71
    %v143 = vpop.permute.xlu0 %142
    %146 = vset.pattern.permute.xlu0 0
    %147 = vperm.xlu0 %146, %v72
    %v148 = vpop.permute.xlu0 %147
    %151 = vset.pattern.permute.xlu0 0
    %152 = vperm.xlu0 %151, %v73
    %v153 = vpop.permute.xlu0 %152
    %v156 = vlaneseq
    %v157 = vshrl.u32 %v156, 7
    %v158 = vsub.s32 0, %v157
    %v159 = vrot.slane %v74, %v158
    %v161 = vmul.f32 %v78, %v159
    %v162 = vmul.f32 %v83, %v159
    %v163 = vmul.f32 %v88, %v159
    %v164 = vmul.f32 %v93, %v159
    %v165 = vmul.f32 %v98, %v159
    %v166 = vmul.f32 %v103, %v159
    %v167 = vmul.f32 %v108, %v159
    %v168 = vmul.f32 %v113, %v159
    %v169 = vmul.f32 %v118, %v159
    %v170 = vmul.f32 %v123, %v159
    %v171 = vmul.f32 %v128, %v159
    %v172 = vmul.f32 %v133, %v159
    %v173 = vmul.f32 %v138, %v159
    %v174 = vmul.f32 %v143, %v159
    %v175 = vmul.f32 %v148, %v159
    %v176 = vmul.f32 %v153, %v159
    %v177 = vld [vmem:[%s1] sm:$0xff]
    %v178 = vld [vmem:[%s1 + $0x8] sm:$0xff]
    %v179 = vld [vmem:[%s1 + $0x10] sm:$0xff]
    %v180 = vld [vmem:[%s1 + $0x18] sm:$0xff]
    %v181 = vld [vmem:[%s1 + $0x20] sm:$0xff]
    %v182 = vld [vmem:[%s1 + $0x28] sm:$0xff]
    %v183 = vld [vmem:[%s1 + $0x30] sm:$0xff]
    %v184 = vld [vmem:[%s1 + $0x38] sm:$0xff]
    %v185 = vld [vmem:[%s1 + $0x40] sm:$0xff]
    %v186 = vld [vmem:[%s1 + $0x48] sm:$0xff]
    %v187 = vld [vmem:[%s1 + $0x50] sm:$0xff]
    %v188 = vld [vmem:[%s1 + $0x58] sm:$0xff]
    %v189 = vld [vmem:[%s1 + $0x60] sm:$0xff]
    %v190 = vld [vmem:[%s1 + $0x68] sm:$0xff]
    %v191 = vld [vmem:[%s1 + $0x70] sm:$0xff]
    %v192 = vld [vmem:[%s1 + $0x78] sm:$0xff]
    %v193 = vld [vmem:[#allocation6] sm:$0xff]
    %v194 = vld [vmem:[#allocation6 + $0x8] sm:$0xff]
    %v195 = vld [vmem:[#allocation6 + $0x10] sm:$0xff]
    %v196 = vld [vmem:[#allocation6 + $0x18] sm:$0xff]
    %v197 = vld [vmem:[#allocation6 + $0x20] sm:$0xff]
    %v198 = vld [vmem:[#allocation6 + $0x28] sm:$0xff]
    %v199 = vld [vmem:[#allocation6 + $0x30] sm:$0xff]
    %v200 = vld [vmem:[#allocation6 + $0x38] sm:$0xff]
    %v201 = vld [vmem:[#allocation6 + $0x40] sm:$0xff]
    %v202 = vld [vmem:[#allocation6 + $0x48] sm:$0xff]
    %v203 = vld [vmem:[#allocation6 + $0x50] sm:$0xff]
    %v204 = vld [vmem:[#allocation6 + $0x58] sm:$0xff]
    %v205 = vld [vmem:[#allocation6 + $0x60] sm:$0xff]
    %v206 = vld [vmem:[#allocation6 + $0x68] sm:$0xff]
    %v207 = vld [vmem:[#allocation6 + $0x70] sm:$0xff]
    %v208 = vld [vmem:[#allocation6 + $0x78] sm:$0xff]
    %v209 = vmul.f32 %v193, %v161
    %v210 = vmul.f32 %v194, %v162
    %v211 = vmul.f32 %v195, %v163
    %v212 = vmul.f32 %v196, %v164
    %v213 = vmul.f32 %v197, %v165
    %v214 = vmul.f32 %v198, %v166
    %v215 = vmul.f32 %v199, %v167
    %v216 = vmul.f32 %v200, %v168
    %v217 = vmul.f32 %v201, %v169
    %v218 = vmul.f32 %v202, %v170
    %v219 = vmul.f32 %v203, %v171
    %v220 = vmul.f32 %v204, %v172
    %v221 = vmul.f32 %v205, %v173
    %v222 = vmul.f32 %v206, %v174
    %v223 = vmul.f32 %v207, %v175
    %v224 = vmul.f32 %v208, %v176
    %v225 = vadd.f32 %v177, %v209
    %v226 = vadd.f32 %v178, %v210
    %v227 = vadd.f32 %v179, %v211
    %v228 = vadd.f32 %v180, %v212
    %v229 = vadd.f32 %v181, %v213
    %v230 = vadd.f32 %v182, %v214
    %v231 = vadd.f32 %v183, %v215
    %v232 = vadd.f32 %v184, %v216
    %v233 = vadd.f32 %v185, %v217
    %v234 = vadd.f32 %v186, %v218
    %v235 = vadd.f32 %v187, %v219
    %v236 = vadd.f32 %v188, %v220
    %v237 = vadd.f32 %v189, %v221
    %v238 = vadd.f32 %v190, %v222
    %v239 = vadd.f32 %v191, %v223
    %v240 = vadd.f32 %v192, %v224
    %v241 = vld [vmem:[#allocation2] sm:$0xff]
    %v242 = vld [vmem:[#allocation3] sm:$0xff]
    %243 = vmatprep.subr.mxu0 0.0
    %244 = vmatpush1.msra.mxu0 %v225
    %245 = vmatprep.subr.mxu0 0.0
    %246 = vmatpush1.msra.mxu0 %v226
    %247 = vmatprep.subr.mxu0 0.0
    %248 = vmatpush1.msra.mxu0 %v227
    %249 = vmatprep.subr.mxu0 0.0
    %250 = vmatpush1.msra.mxu0 %v228
    %251 = vmatprep.subr.mxu0 0.0
    %252 = vmatpush1.msra.mxu0 %v229
    %253 = vmatprep.subr.mxu0 0.0
    %254 = vmatpush1.msra.mxu0 %v230
    %255 = vmatprep.subr.mxu0 0.0
    %256 = vmatpush1.msra.mxu0 %v231
    %257 = vmatprep.subr.mxu0 0.0
    %258 = vmatpush1.msra.mxu0 %v232
    %259 = vmatprep.subr.mxu0 0.0
    %260 = vmatpush1.msra.mxu0 %v233
    %261 = vmatprep.subr.mxu0 0.0
    %262 = vmatpush1.msra.mxu0 %v234
    %263 = vmatprep.subr.mxu0 0.0
    %264 = vmatpush1.msra.mxu0 %v235
    %265 = vmatprep.subr.mxu0 0.0
    %266 = vmatpush1.msra.mxu0 %v236
    %267 = vmatprep.subr.mxu0 0.0
    %268 = vmatpush1.msra.mxu0 %v237
    %269 = vmatprep.subr.mxu0 0.0
    %270 = vmatpush1.msra.mxu0 %v238
    %271 = vmatprep.subr.mxu0 0.0
    %272 = vmatpush1.msra.mxu0 %v239
    %273 = vmatprep.subr.mxu0 0.0
    %274 = vmatpush1.msra.mxu0 %v240
    %275 = vmatprep.subr.mxu0 0.0
    %276 = vmatpush1.msra.mxu0 0.0
    %277 = vmatprep.subr.mxu0 0.0
    %278 = vmatpush1.msra.mxu0 0.0
    %279 = vmatprep.subr.mxu0 0.0
    %280 = vmatpush1.msra.mxu0 0.0
    %281 = vmatprep.subr.mxu0 0.0
    %282 = vmatpush1.msra.mxu0 0.0
    %283 = vmatprep.subr.mxu0 0.0
    %284 = vmatpush1.msra.mxu0 0.0
    %285 = vmatprep.subr.mxu0 0.0
    %286 = vmatpush1.msra.mxu0 0.0
    %287 = vmatprep.subr.mxu0 0.0
    %288 = vmatpush1.msra.mxu0 0.0
    %289 = vmatprep.subr.mxu0 0.0
    %290 = vmatpush1.msra.mxu0 0.0
    %291 = vmatprep.subr.mxu0 0.0
    %292 = vmatpush1.msra.mxu0 0.0
    %293 = vmatprep.subr.mxu0 0.0
    %294 = vmatpush1.msra.mxu0 0.0
    %295 = vmatprep.subr.mxu0 0.0
    %296 = vmatpush1.msra.mxu0 0.0
    %297 = vmatprep.subr.mxu0 0.0
    %298 = vmatpush1.msra.mxu0 0.0
    %299 = vmatprep.subr.mxu0 0.0
    %300 = vmatpush1.msra.mxu0 0.0
    %301 = vmatprep.subr.mxu0 0.0
    %302 = vmatpush1.msra.mxu0 0.0
    %303 = vmatprep.subr.mxu0 0.0
    %304 = vmatpush1.msra.mxu0 0.0
    %305 = vmatprep.subr.mxu0 0.0
    %306 = vmatpush1.msra.mxu0 0.0
    %307 = vmatprep.mubr.f32.mxu0 0.0
    %308 = vmatmul.mubr.f32.gmra.mrb[0].mxu0 %v242
    %v309 = vpop.f32.mrb[0].mxu0
    %v310 = vadd.f32 0.0, %v309
    %v311 = vpop.f32.mrb[0].mxu0
    %312 = vdwg.mxu0
    %v313 = vadd.f32 %v241, %v310
    %314 = vst [vmem:[#allocation2] sm:$0xff] %v313
    // Predicated region
    $region42: #{tpu_custom_call.1} parent=1 // pred_check
      %p315 = pneg %p53
    $region43: #{tpu_custom_call.1} parent=1 // pred_check_branch
      %317 = sbr.rel (%p315) target = $region45
    $region44: #{tpu_custom_call.1} parent=1 // pred_region
      %v318 = vld [vmem:[%s5] sm:$0x1]
      %v319 = vld [vmem:[%s6] sm:$0x1]
      %v320 = vld [vmem:[%s4] sm:$0x1]
      %v321 = vmul.f32 %v319, %v320
      %v322 = vadd.f32 %v318, %v321
      %v323 = vld [vmem:[#allocation2] sm:$0xff]
      %v325 = vlaneseq
      %v326 = vshrl.u32 %v325, 7
      %v327 = vsub.s32 0, %v326
      %v328 = vrot.slane %v322, %v327
      %v330 = vadd.f32 %v323, %v328
      %331 = vst [vmem:[#allocation8] sm:$0xff] %v330
    $region45: #{tpu_custom_call.1} parent=1 // pred_fallthru
      _
    // Predicated region
    $region46: #{tpu_custom_call.1} parent=1 // pred_check
      _
    $region47: #{tpu_custom_call.1} parent=1 // pred_check_branch
      %333 = sbr.rel (0) target = $region49
    $region48: #{tpu_custom_call.1} parent=1 // pred_region
      %s335 = ssub.s32 128, 128
      %336 = vsyncadd [#allocation5], %s335
      %s338 = sshll.u32 [#allocation8], 4
      %s339 = int_to_ptr.vmem [resolvable:$true] %s338
      %341 = dma.vmem_to_hbm [thread:$0]  %s339, 128, %s7, [#allocation5]
    $region49: #{tpu_custom_call.1} parent=1 // pred_fallthru
      _
    // Predicated region
    $region50: #{tpu_custom_call.1} parent=1 // pred_check
      _
    $region51: #{tpu_custom_call.1} parent=1 // pred_check_branch
      %343 = sbr.rel (0) target = $region53
    $region52: #{tpu_custom_call.1} parent=1 // pred_region
      %344 = dma.done [#allocation5], 128
    $region53: #{tpu_custom_call.1} parent=1 // pred_fallthru
      _
    %345 = vsyncpa [#allocation4], 1
    %346 = vsyncpa [#allocation7], 1
    %347 = vsyncpa [#allocation5], 1

</llo_original>
